<compile_context>
chip_gen: v7x
topology: tpu7x:2x2x1
jax: 0.10.0
libtpu: 0.0.40
codegen_flags: <defaults>
</compile_context>

<pallas_src>
import functools

import jax
import jax.numpy as jnp
from jax.experimental import pallas as pl
from jax.experimental.pallas import tpu as pltpu


def _round_up(v, m):
    return ((v + m - 1) // m) * m


# ----------------------------------------------------------------------------
# Primary path: strided HBM->HBM DMA copy of the interior window (no VMEM).
# ----------------------------------------------------------------------------
def _crop_dma_kernel(x_hbm, o_hbm, copy_sems, *, chunks, H, W):
    Ho, Wo = H - 2, W - 2
    copies = []
    # Start every chunk's DMA before waiting so several DMA engines overlap.
    for k, (start, size) in enumerate(chunks):
        cp = pltpu.make_async_copy(
            x_hbm.at[pl.ds(start, size), pl.ds(1, Ho), pl.ds(1, Wo)],
            o_hbm.at[pl.ds(start, size)],
            copy_sems.at[k],
        )
        cp.start()
        copies.append(cp)
    for cp in copies:
        cp.wait()


def _crop_dma(x2):
    NC, H, W = x2.shape
    Ho, Wo = H - 2, W - 2
    itemsize = jnp.dtype(x2.dtype).itemsize
    out_bytes = NC * Ho * Wo * itemsize

    # A few concurrent DMAs (>= ~1 MiB each when the tensor allows) keep the
    # copy engines busy; tiny tensors just use a single DMA.
    n_chunks = int(max(1, min(8, NC, out_bytes // (1 << 20))))
    csz = pl.cdiv(NC, n_chunks)
    chunks = tuple((s, min(csz, NC - s)) for s in range(0, NC, csz))

    kernel = functools.partial(_crop_dma_kernel, chunks=chunks, H=H, W=W)
    return pl.pallas_call(
        kernel,
        out_shape=jax.ShapeDtypeStruct((NC, Ho, Wo), x2.dtype),
        in_specs=[pl.BlockSpec(memory_space=pl.ANY)],
        out_specs=pl.BlockSpec(memory_space=pl.ANY),
        scratch_shapes=[pltpu.SemaphoreType.DMA((len(chunks),))],
        cost_estimate=pl.CostEstimate(
            flops=0, transcendentals=0, bytes_accessed=2 * out_bytes),
    )(x2)


@functools.lru_cache(maxsize=None)
def _dma_path_available() -> bool:
    """One-time probe: do interior-offset strided HBM->HBM DMAs lower and
    produce correct results on this backend/toolchain?"""
    try:
        x = jnp.arange(4 * 8 * 8, dtype=jnp.float32).reshape(4, 8, 8)
        y = _crop_dma(x)
        return bool(jnp.array_equal(y, x[:, 1:-1, 1:-1]))
    except Exception:
        return False


# ----------------------------------------------------------------------------
# Fallback path: pipelined full-plane VMEM blocks + in-register interior copy.
# ----------------------------------------------------------------------------
def _crop_vreg_kernel(x_ref, o_ref):
    H, W = x_ref.shape[1], x_ref.shape[2]
    o_ref[...] = x_ref[:, 1:H - 1, 1:W - 1]


def _crop_pipelined(x2):
    NC, H, W = x2.shape
    Ho, Wo = H - 2, W - 2
    itemsize = jnp.dtype(x2.dtype).itemsize

    # Padded VMEM footprint per plane: last dim rounds up to 128 lanes, the
    # second-to-last to the dtype sublane tile (8 f32 / 16 bf16 / 32 int8).
    sub = max(8, 32 // itemsize)
    plane_pad = (_round_up(H, sub) * _round_up(W, 128)
                 + _round_up(Ho, sub) * _round_up(Wo, 128)) * itemsize

    # Generation-aware budgets: v7x has 64 MiB physical VMEM (keep scoped
    # limit <= ~48 MiB); v5e/v6e have 128 MiB so bigger blocks amortise the
    # ~0.35 us/step overhead.
    try:
        vmem_cap = getattr(pltpu.get_tpu_info(), "vmem_capacity_bytes",
                           64 * 1024 * 1024)
    except Exception:
        vmem_cap = 64 * 1024 * 1024
    if vmem_cap >= 128 * 1024 * 1024:        # v5e / v6e
        vmem_limit, block_budget = 96 * 1024 * 1024, 64 * 1024 * 1024
    else:                                    # v7x (64 MiB physical)
        vmem_limit, block_budget = 48 * 1024 * 1024, 28 * 1024 * 1024

    # Planes per grid step: fit double-buffered (2x in + 2x out) *padded*
    # blocks in the budget, target >= 8 grid steps for real pipelining /
    # megacore balance, but keep blocks >= ~1 MiB padded when the data allows.
    cb_budget = max(1, block_budget // (2 * plane_pad))
    cb_steps = max(1, pl.cdiv(NC, 8))
    cb_floor = max(1, (1 << 20) // plane_pad)
    cb = min(cb_budget, NC, max(cb_steps, min(cb_floor, NC)))
    # TODO(synk): intra-plane H-tiling for planes whose double-buffered padded
    # blocks exceed the budget even at cb=1 (only matters when the HBM->HBM
    # DMA path above is unavailable).
    vmem_limit = max(vmem_limit, min(2 * cb * plane_pad + (2 << 20), vmem_cap))
    grid = (pl.cdiv(NC, cb),)

    return pl.pallas_call(
        _crop_vreg_kernel,
        out_shape=jax.ShapeDtypeStruct((NC, Ho, Wo), x2.dtype),
        grid_spec=pltpu.PrefetchScalarGridSpec(
            num_scalar_prefetch=0,
            grid=grid,
            in_specs=[
                # Last two block dims equal the full array dims, satisfying the
                # (8, 128) block constraint for any H, W and dtype.
                pl.BlockSpec((cb, H, W), lambda i: (i, 0, 0)),
            ],
            out_specs=pl.BlockSpec((cb, Ho, Wo), lambda i: (i, 0, 0)),
        ),
        compiler_params=pltpu.CompilerParams(
            dimension_semantics=("parallel",),
            vmem_limit_bytes=int(vmem_limit),
        ),
        cost_estimate=pl.CostEstimate(
            flops=0, transcendentals=0,
            bytes_accessed=NC * (H * W + Ho * Wo) * itemsize),
    )(x2)


# ----------------------------------------------------------------------------
# Public wrapper (PyTorch Crop.forward semantics).
# ----------------------------------------------------------------------------
def crop(x, crop_px=1):
    """Pallas implementation of Crop(crop=1): x[:, :, 1:-1, 1:-1]."""
    assert crop_px == 1, "reference module hard-codes a 1-pixel crop"
    N, C, H, W = x.shape
    assert H >= 3 and W >= 3, "crop needs spatial dims >= 3"
    Ho, Wo = H - 2, W - 2
    x2 = x.reshape(N * C, H, W)   # free metadata reshape; fuse N and C

    if _dma_path_available():
        try:
            return _crop_dma(x2).reshape(N, C, Ho, Wo)
        except Exception:
            pass  # shouldn't happen once the probe passed; fall through
    return _crop_pipelined(x2).reshape(N, C, Ho, Wo)


if __name__ == "__main__":
    key = jax.random.PRNGKey(0)
    x = jax.random.normal(key, (2, 4, 16, 16), dtype=jnp.float32)

    y = crop(x)
    jax.block_until_ready(y)

    # Correctness check against plain-JAX reference of the PyTorch semantics.
    y_ref = x[:, :, 1:-1, 1:-1]
    assert y.shape == (2, 4, 14, 14), y.shape
    assert jnp.array_equal(y, y_ref), "mismatch vs reference crop"

    print("KERNEL_OK")
</pallas_src>

<mosaic_0001>
module attributes {stable_mosaic.version = 11 : i64} {
  func.func @_crop_dma_kernel(%arg0: memref<4x8x8xf32, #tpu.memory_space<any>>, %arg1: memref<4x6x6xf32, #tpu.memory_space<any>>, %arg2: memref<1x!tpu.dma_semaphore, #tpu.memory_space<semaphore_mem>>) attributes {dimension_semantics = [], scalar_prefetch = 0 : i64, scratch_operands = 1 : i64, tpu.core_type = #tpu.core_type<tc>} {
    %c0_i32 = arith.constant 0 : i32
    %c0_i32_0 = arith.constant 0 : i32
    %c1_i32 = arith.constant 1 : i32
    %c1_i32_1 = arith.constant 1 : i32
    %0 = tpu.memref_slice %arg0[%c0_i32_0, %c1_i32, %c1_i32_1] : memref<4x8x8xf32, #tpu.memory_space<any>> -> memref<4x6x6xf32, #tpu.memory_space<any>>
    %c0_i32_2 = arith.constant 0 : i32
    %c0_i32_3 = arith.constant 0 : i32
    %c0_i32_4 = arith.constant 0 : i32
    %1 = tpu.memref_slice %arg1[%c0_i32_2, %c0_i32_3, %c0_i32_4] : memref<4x6x6xf32, #tpu.memory_space<any>> -> memref<4x6x6xf32, #tpu.memory_space<any>>
    %2 = tpu.memref_slice %arg2[%c0_i32] : memref<1x!tpu.dma_semaphore, #tpu.memory_space<semaphore_mem>> -> memref<1x!tpu.dma_semaphore, #tpu.memory_space<semaphore_mem>>
    %3 = tpu.memref_squeeze %2 : memref<1x!tpu.dma_semaphore, #tpu.memory_space<semaphore_mem>> -> memref<!tpu.dma_semaphore, #tpu.memory_space<semaphore_mem>>
    tpu.enqueue_dma source(%0 : memref<4x6x6xf32, #tpu.memory_space<any>>) target(%1 : memref<4x6x6xf32, #tpu.memory_space<any>>) target_semaphore(%3 : memref<!tpu.dma_semaphore, #tpu.memory_space<semaphore_mem>>)
    %c0_i32_5 = arith.constant 0 : i32
    %c0_i32_6 = arith.constant 0 : i32
    %c1_i32_7 = arith.constant 1 : i32
    %c1_i32_8 = arith.constant 1 : i32
    %4 = tpu.memref_slice %arg0[%c0_i32_6, %c1_i32_7, %c1_i32_8] : memref<4x8x8xf32, #tpu.memory_space<any>> -> memref<4x6x6xf32, #tpu.memory_space<any>>
    %c0_i32_9 = arith.constant 0 : i32
    %c0_i32_10 = arith.constant 0 : i32
    %c0_i32_11 = arith.constant 0 : i32
    %5 = tpu.memref_slice %arg1[%c0_i32_9, %c0_i32_10, %c0_i32_11] : memref<4x6x6xf32, #tpu.memory_space<any>> -> memref<4x6x6xf32, #tpu.memory_space<any>>
    %6 = tpu.memref_slice %arg2[%c0_i32_5] : memref<1x!tpu.dma_semaphore, #tpu.memory_space<semaphore_mem>> -> memref<1x!tpu.dma_semaphore, #tpu.memory_space<semaphore_mem>>
    %7 = tpu.memref_squeeze %6 : memref<1x!tpu.dma_semaphore, #tpu.memory_space<semaphore_mem>> -> memref<!tpu.dma_semaphore, #tpu.memory_space<semaphore_mem>>
    tpu.wait_dma2 semaphore(%7 : memref<!tpu.dma_semaphore, #tpu.memory_space<semaphore_mem>>) src(%4 : memref<4x6x6xf32, #tpu.memory_space<any>>) dst(%5 : memref<4x6x6xf32, #tpu.memory_space<any>>)
    return
  }
}

module attributes {stable_mosaic.version = 11 : i64} {
  func.func @_crop_vreg_kernel(%arg0: i32, %arg1: memref<8x16x16xf32, #tpu.memory_space<vmem>>, %arg2: memref<8x14x14xf32, #tpu.memory_space<vmem>>) attributes {dimension_semantics = [#tpu.dimension_semantics<parallel>], iteration_bounds = array<i64: 1>, scalar_prefetch = 0 : i64, scratch_operands = 0 : i64, tpu.core_type = #tpu.core_type<tc>, window_params = [{transform_indices = @transform_0, window_bounds = array<i64: 8, 16, 16>}, {transform_indices = @transform_1, window_bounds = array<i64: 8, 14, 14>}]} {
    %c0 = arith.constant 0 : index
    %c1 = arith.constant 1 : index
    %c1_0 = arith.constant 1 : index
    %0 = vector.load %arg1[%c0, %c1, %c1_0] : memref<8x16x16xf32, #tpu.memory_space<vmem>>, vector<8x14x14xf32>
    %c0_1 = arith.constant 0 : index
    %c0_2 = arith.constant 0 : index
    %c0_3 = arith.constant 0 : index
    %1 = vector.load %arg2[%c0_1, %c0_2, %c0_3] : memref<8x14x14xf32, #tpu.memory_space<vmem>>, vector<8x14x14xf32>
    tpu.vector_store %arg2[%c0_1, %c0_2, %c0_3], %0 {strides = array<i32>} : memref<8x14x14xf32, #tpu.memory_space<vmem>>, vector<8x14x14xf32>,
    return
  }
  func.func @transform_0(%arg0: i32) -> (i32, i32, i32) {
    %c0_i32 = arith.constant 0 : i32
    %c0_i32_0 = arith.constant 0 : i32
    %c0_i32_1 = arith.constant 0 : i32
    return %arg0, %c0_i32, %c0_i32_0 : i32, i32, i32
  }
  func.func @transform_1(%arg0: i32) -> (i32, i32, i32) {
    %c0_i32 = arith.constant 0 : i32
    %c0_i32_0 = arith.constant 0 : i32
    %c0_i32_1 = arith.constant 0 : i32
    return %arg0, %c0_i32, %c0_i32_0 : i32, i32, i32
  }
}

</mosaic_0001>

<llo_original>
// kernel: tpu_custom_call.1
$region0: #{tpu_custom_call.1}
  #allocation0 [shape = 'u32[]', space=smem, size = 0x4, offset = 0x4, fixed_abs, tag = 'smem constant byte address 0x4 - core index']
  #allocation1 [shape = 'u32[144,128]{1,0:T(1,128)}', space=vmem, size = 0x12000, scoped, tag = 'internal scratch']
  %s0 = inlined_call_operand.hbm [shape: f32[8,16,16], index: 0, kind: input, shape index: {}]
  %s1 = inlined_call_operand.vmem [shape: f32[8,14,14], index: 1, kind: output, shape index: {}]
  %s2 = sld [smem:[#allocation0]]
  $region18: #{tpu_custom_call.1} parent=0
    _
  %s4 = ssub.s32 1, %s2
  %s5 = scalar_select 0, %s4, %s2
  $region1: #{tpu_custom_call.1} parent=0
    #allocation2 [shape = 'u8[65536]{0}', space=vmem, size = 0x10000, scoped, tag = 'input window, operand 0, single buffered']
    #allocation3 [shape = 's32[1]{0}', space=sflag, size = 0x4, scoped, tag = 'scoped memory for tpu_custom_call.1']
    %6 = vsyncpa [#allocation3], 0
    // Predicated region
    $region2: #{tpu_custom_call.1} parent=1 // pred_check
      _
    $region3: #{tpu_custom_call.1} parent=1 // pred_check_branch
      %8 = sbr.rel (0) target = $region5
    $region4: #{tpu_custom_call.1} parent=1 // pred_region
      %s10 = ssub.s32 2048, 2048
      %11 = vsyncadd [#allocation3], %s10
      %s12 = sshll.u32 [#allocation2], 4
      %s13 = int_to_ptr.vmem [resolvable:$true] %s12
      %18 = dma.hbm_to_vmem [thread:$0]  %s0, 2048, %s13, [#allocation3], 128, 128, 8
    $region5: #{tpu_custom_call.1} parent=1 // pred_fallthru
      _
    // Predicated region
    $region6: #{tpu_custom_call.1} parent=1 // pred_check
      _
    $region7: #{tpu_custom_call.1} parent=1 // pred_check_branch
      %20 = sbr.rel (0) target = $region9
    $region8: #{tpu_custom_call.1} parent=1 // pred_region
      %21 = dma.done [#allocation3], 2048
    $region9: #{tpu_custom_call.1} parent=1 // pred_fallthru
      _
    %v22 = vld [vmem:[#allocation2 + $0x1] sm:$0xff]
    %v23 = vld [vmem:[#allocation2 + $0x9] sm:$0x3f]
    %v24 = vld [vmem:[#allocation2 + $0x11] sm:$0xff]
    %v25 = vld [vmem:[#allocation2 + $0x19] sm:$0x3f]
    %v26 = vld [vmem:[#allocation2 + $0x21] sm:$0xff]
    %v27 = vld [vmem:[#allocation2 + $0x29] sm:$0x3f]
    %v28 = vld [vmem:[#allocation2 + $0x31] sm:$0xff]
    %v29 = vld [vmem:[#allocation2 + $0x39] sm:$0x3f]
    %v30 = vld [vmem:[#allocation2 + $0x41] sm:$0xff]
    %v31 = vld [vmem:[#allocation2 + $0x49] sm:$0x3f]
    %v32 = vld [vmem:[#allocation2 + $0x51] sm:$0xff]
    %v33 = vld [vmem:[#allocation2 + $0x59] sm:$0x3f]
    %v34 = vld [vmem:[#allocation2 + $0x61] sm:$0xff]
    %v35 = vld [vmem:[#allocation2 + $0x69] sm:$0x3f]
    %v36 = vld [vmem:[#allocation2 + $0x71] sm:$0xff]
    %v37 = vld [vmem:[#allocation2 + $0x79] sm:$0x3f]
    %54 = vrot.lane.b32.xlu0 %v22, 127
    %v55 = vpop.permute.xlu0 %54
    %56 = vrot.lane.b32.xlu0 %v23, 127
    %v57 = vpop.permute.xlu0 %56
    %58 = vrot.lane.b32.xlu0 %v24, 127
    %v59 = vpop.permute.xlu0 %58
    %60 = vrot.lane.b32.xlu0 %v25, 127
    %v61 = vpop.permute.xlu0 %60
    %62 = vrot.lane.b32.xlu0 %v26, 127
    %v63 = vpop.permute.xlu0 %62
    %64 = vrot.lane.b32.xlu0 %v27, 127
    %v65 = vpop.permute.xlu0 %64
    %66 = vrot.lane.b32.xlu0 %v28, 127
    %v67 = vpop.permute.xlu0 %66
    %68 = vrot.lane.b32.xlu0 %v29, 127
    %v69 = vpop.permute.xlu0 %68
    %70 = vrot.lane.b32.xlu0 %v30, 127
    %v71 = vpop.permute.xlu0 %70
    %72 = vrot.lane.b32.xlu0 %v31, 127
    %v73 = vpop.permute.xlu0 %72
    %74 = vrot.lane.b32.xlu0 %v32, 127
    %v75 = vpop.permute.xlu0 %74
    %76 = vrot.lane.b32.xlu0 %v33, 127
    %v77 = vpop.permute.xlu0 %76
    %78 = vrot.lane.b32.xlu0 %v34, 127
    %v79 = vpop.permute.xlu0 %78
    %80 = vrot.lane.b32.xlu0 %v35, 127
    %v81 = vpop.permute.xlu0 %80
    %82 = vrot.lane.b32.xlu0 %v36, 127
    %v83 = vpop.permute.xlu0 %82
    %84 = vrot.lane.b32.xlu0 %v37, 127
    %v85 = vpop.permute.xlu0 %84
    %vm102 = vcmask 113664
    %103 = vst.msk [vmem:[%s1] sm:$0xff] %vm102, %v55
    %vm104 = vcmask 111616
    %105 = vst.msk [vmem:[%s1 + $0x8] sm:$0x3f] %vm104, %v57
    %106 = vst.msk [vmem:[%s1 + $0x10] sm:$0xff] %vm102, %v59
    %107 = vst.msk [vmem:[%s1 + $0x18] sm:$0x3f] %vm104, %v61
    %108 = vst.msk [vmem:[%s1 + $0x20] sm:$0xff] %vm102, %v63
    %109 = vst.msk [vmem:[%s1 + $0x28] sm:$0x3f] %vm104, %v65
    %110 = vst.msk [vmem:[%s1 + $0x30] sm:$0xff] %vm102, %v67
    %111 = vst.msk [vmem:[%s1 + $0x38] sm:$0x3f] %vm104, %v69
    %112 = vst.msk [vmem:[%s1 + $0x40] sm:$0xff] %vm102, %v71
    %113 = vst.msk [vmem:[%s1 + $0x48] sm:$0x3f] %vm104, %v73
    %114 = vst.msk [vmem:[%s1 + $0x50] sm:$0xff] %vm102, %v75
    %115 = vst.msk [vmem:[%s1 + $0x58] sm:$0x3f] %vm104, %v77
    %116 = vst.msk [vmem:[%s1 + $0x60] sm:$0xff] %vm102, %v79
    %117 = vst.msk [vmem:[%s1 + $0x68] sm:$0x3f] %vm104, %v81
    %118 = vst.msk [vmem:[%s1 + $0x70] sm:$0xff] %vm102, %v83
    %119 = vst.msk [vmem:[%s1 + $0x78] sm:$0x3f] %vm104, %v85
    // Predicated region
    $region10: #{tpu_custom_call.1} parent=1 // pred_check
      _
    $region11: #{tpu_custom_call.1} parent=1 // pred_check_branch
      %121 = sbr.rel (0) target = $region13
    $region12: #{tpu_custom_call.1} parent=1 // pred_region
      _
    $region13: #{tpu_custom_call.1} parent=1 // pred_fallthru
      _
    // Predicated region
    $region14: #{tpu_custom_call.1} parent=1 // pred_check
      _
    $region15: #{tpu_custom_call.1} parent=1 // pred_check_branch
      %123 = sbr.rel (0) target = $region17
    $region16: #{tpu_custom_call.1} parent=1 // pred_region
      _
    $region17: #{tpu_custom_call.1} parent=1 // pred_fallthru
      _
    %124 = vsyncpa [#allocation3], 1

</llo_original>
